<compile_context>
chip_gen: v7x
topology: tpu7x:2x2x1
jax: 0.10.0
libtpu: 0.0.40
codegen_flags: <defaults>
</compile_context>

<pallas_src>
import jax
import jax.numpy as jnp
from jax.experimental import pallas as pl
from jax.experimental.pallas import tpu as pltpu

IN_DIM, H1, H2, OUT_DIM = 200, 128, 64, 1
H2_PAD = 128                 # lane-dense fc2 output (zero-padded, exact math)

# Batch tile: conservative for v7x (64 MiB VMEM/TC).  bf16 x tile at 4096 rows
# is ~1.6 MiB (x2 double-buffered), f32 intermediates ~2 MiB each -> well under
# the 32 MiB scoped default.  On v5e/v6e (128 MiB VMEM) 8192 also works.
TB_MAX = 4096


def _round_up(n, m):
    return (n + m - 1) // m * m


def _mlp_kernel(x_ref, w1_ref, b1_ref, w2_ref, b2_ref, w3_ref, b3_ref, o_ref):
    x = x_ref[...]                                                     # [TB,200] bf16

    # fc1: bf16 MXU matmul, f32 accumulate; bias + relu in f32 (VPU).
    h = jnp.dot(x, w1_ref[...], preferred_element_type=jnp.float32)   # [TB,128]
    h = jnp.maximum(h + b1_ref[...], 0.0)

    # fc2: cast activations to bf16 for the MXU, accumulate f32.
    h = jnp.dot(h.astype(jnp.bfloat16), w2_ref[...],
                preferred_element_type=jnp.float32)                   # [TB,128] (H2 padded)
    h = jnp.maximum(h + b2_ref[...], 0.0)

    # fc3 (N=1): skip the MXU -- VPU multiply + XLU lane reduction, all f32.
    z = jnp.sum(h * w3_ref[...], axis=-1, keepdims=True) + b3_ref[...]  # [TB,1]

    # sigmoid: exp + approx reciprocal both land on the EUP slot.
    o_ref[...] = pl.reciprocal(1.0 + jnp.exp(-z), approx=True)


def emb_mnn_classifier(x, params, tb=None):
    """x: [B, 200] float32. params: dict of PyTorch-convention weights."""
    B = x.shape[0]
    if tb is None:
        tb = min(TB_MAX, _round_up(max(B, 1), 8))
    tb = _round_up(tb, 8)
    b_pad = _round_up(B, tb)

    # Activation shipped in bf16 (halves HBM bytes of the dominant stream).
    xb = x.astype(jnp.bfloat16)
    if b_pad != B:
        xb = jnp.pad(xb, ((0, b_pad - B), (0, 0)))

    # Glue (not hot path): transpose to [in, out], cast matmul weights to bf16,
    # zero-pad H2 64 -> 128 (exact: padded h columns are 0, padded w3 entries 0).
    w1t = params["w1"].T.astype(jnp.bfloat16)                              # [200,128]
    w2t = jnp.zeros((H1, H2_PAD), jnp.bfloat16).at[:, :H2].set(
        params["w2"].T.astype(jnp.bfloat16))                               # [128,128]
    b1 = params["b1"].reshape(1, H1).astype(jnp.float32)
    b2 = jnp.zeros((1, H2_PAD), jnp.float32).at[:, :H2].set(
        params["b2"].reshape(1, H2).astype(jnp.float32))
    w3r = jnp.zeros((1, H2_PAD), jnp.float32).at[:, :H2].set(
        params["w3"].reshape(1, H2).astype(jnp.float32))                   # row vector
    b3 = params["b3"].reshape(1, OUT_DIM).astype(jnp.float32)

    const = lambda shape: pl.BlockSpec(shape, lambda i: (0, 0))

    out = pl.pallas_call(
        _mlp_kernel,
        out_shape=jax.ShapeDtypeStruct((b_pad, OUT_DIM), jnp.float32),
        grid=(b_pad // tb,),
        in_specs=[
            pl.BlockSpec((tb, IN_DIM), lambda i: (i, 0)),   # x: tiled over batch
            const((IN_DIM, H1)),                            # weights/biases resident
            const((1, H1)),
            const((H1, H2_PAD)),
            const((1, H2_PAD)),
            const((1, H2_PAD)),
            const((1, OUT_DIM)),
        ],
        out_specs=pl.BlockSpec((tb, OUT_DIM), lambda i: (i, 0)),
        compiler_params=pltpu.CompilerParams(
            dimension_semantics=("parallel",),              # megacore on v7x
            vmem_limit_bytes=32 << 20,
        ),
    )(xb, w1t, b1, w2t, b2, w3r, b3)

    return out[:B]


def init_params(key):
    """Deterministic synthetic parameters with PyTorch nn.Linear shapes."""
    ks = jax.random.split(key, 6)

    def lin(kw, kb, out_dim, in_dim):
        bound = 1.0 / jnp.sqrt(in_dim)
        w = jax.random.uniform(kw, (out_dim, in_dim), jnp.float32, -bound, bound)
        b = jax.random.uniform(kb, (out_dim,), jnp.float32, -bound, bound)
        return w, b

    w1, b1 = lin(ks[0], ks[1], H1, IN_DIM)
    w2, b2 = lin(ks[2], ks[3], H2, H1)
    w3, b3 = lin(ks[4], ks[5], OUT_DIM, H2)
    return {"w1": w1, "b1": b1, "w2": w2, "b2": b2, "w3": w3, "b3": b3}


def _ref_forward(x, p):
    h = jnp.maximum(x @ p["w1"].T + p["b1"], 0.0)
    h = jnp.maximum(h @ p["w2"].T + p["b2"], 0.0)
    return jax.nn.sigmoid(h @ p["w3"].T + p["b3"])


if __name__ == "__main__":
    key = jax.random.PRNGKey(0)
    kx, kp = jax.random.split(key)
    params = init_params(kp)

    # Small case (single tile).
    B = 8
    x = jax.random.normal(kx, (B, IN_DIM), jnp.float32)
    out = jax.block_until_ready(emb_mnn_classifier(x, params))
    ref = _ref_forward(x, params)
    assert out.shape == (B, OUT_DIM)
    # bf16 matmul inputs -> loosened tolerance vs the f32 reference.
    assert jnp.allclose(out, ref, atol=2e-2, rtol=2e-2), float(jnp.max(jnp.abs(out - ref)))

    # Multi-tile + padding path (forces grid > 1 and exercises the batch tiling).
    B2 = 300
    x2 = jax.random.normal(jax.random.PRNGKey(1), (B2, IN_DIM), jnp.float32)
    out2 = jax.block_until_ready(emb_mnn_classifier(x2, params, tb=128))
    ref2 = _ref_forward(x2, params)
    assert out2.shape == (B2, OUT_DIM)
    assert jnp.allclose(out2, ref2, atol=2e-2, rtol=2e-2), float(jnp.max(jnp.abs(out2 - ref2)))

    print("KERNEL_OK")
</pallas_src>

<mosaic_0001>
module attributes {stable_mosaic.version = 11 : i64} {
  func.func @_mlp_kernel(%arg0: i32, %arg1: memref<8x200xbf16, #tpu.memory_space<vmem>>, %arg2: memref<200x128xbf16, #tpu.memory_space<vmem>>, %arg3: memref<1x128xf32, #tpu.memory_space<vmem>>, %arg4: memref<128x128xbf16, #tpu.memory_space<vmem>>, %arg5: memref<1x128xf32, #tpu.memory_space<vmem>>, %arg6: memref<1x128xf32, #tpu.memory_space<vmem>>, %arg7: memref<1x1xf32, #tpu.memory_space<vmem>>, %arg8: memref<8x1xf32, #tpu.memory_space<vmem>>) attributes {dimension_semantics = [#tpu.dimension_semantics<parallel>], iteration_bounds = array<i64: 1>, scalar_prefetch = 0 : i64, scratch_operands = 0 : i64, tpu.core_type = #tpu.core_type<tc>, window_params = [{transform_indices = @transform_0, window_bounds = array<i64: 8, 200>}, {pipeline_mode = #tpu.pipeline_mode<synchronous>, transform_indices = @transform_1, window_bounds = array<i64: 200, 128>}, {pipeline_mode = #tpu.pipeline_mode<synchronous>, transform_indices = @transform_2, window_bounds = array<i64: 1, 128>}, {pipeline_mode = #tpu.pipeline_mode<synchronous>, transform_indices = @transform_3, window_bounds = array<i64: 128, 128>}, {pipeline_mode = #tpu.pipeline_mode<synchronous>, transform_indices = @transform_4, window_bounds = array<i64: 1, 128>}, {pipeline_mode = #tpu.pipeline_mode<synchronous>, transform_indices = @transform_5, window_bounds = array<i64: 1, 128>}, {pipeline_mode = #tpu.pipeline_mode<synchronous>, transform_indices = @transform_6, window_bounds = array<i64: 1, 1>}, {transform_indices = @transform_7, window_bounds = array<i64: 8, 1>}]} {
    %c0 = arith.constant 0 : index
    %c0_0 = arith.constant 0 : index
    %0 = vector.load %arg1[%c0, %c0_0] : memref<8x200xbf16, #tpu.memory_space<vmem>>, vector<8x200xbf16>
    %c0_1 = arith.constant 0 : index
    %c0_2 = arith.constant 0 : index
    %1 = vector.load %arg2[%c0_1, %c0_2] : memref<200x128xbf16, #tpu.memory_space<vmem>>, vector<200x128xbf16>
    %cst = arith.constant dense<0.000000e+00> : vector<8x128xf32>
    %2 = tpu.matmul %0, %1, %cst {dimension_numbers = #tpu.dot_dimension_numbers<[1], [0], [0], [1], [0, 0, 1, 1], [], []>} : vector<8x200xbf16>, vector<200x128xbf16>, vector<8x128xf32> -> vector<8x128xf32>
    %c0_3 = arith.constant 0 : index
    %c0_4 = arith.constant 0 : index
    %3 = vector.load %arg3[%c0_3, %c0_4] : memref<1x128xf32, #tpu.memory_space<vmem>>, vector<1x128xf32>
    %4 = vector.broadcast %3 : vector<1x128xf32> to vector<8x128xf32>
    %5 = arith.addf %2, %4 : vector<8x128xf32>
    %cst_5 = arith.constant 0.000000e+00 : f32
    %6 = vector.broadcast %cst_5 : f32 to vector<8x128xf32>
    %7 = arith.maximumf %5, %6 : vector<8x128xf32>
    %8 = arith.truncf %7 : vector<8x128xf32> to vector<8x128xbf16>
    %c0_6 = arith.constant 0 : index
    %c0_7 = arith.constant 0 : index
    %9 = vector.load %arg4[%c0_6, %c0_7] : memref<128x128xbf16, #tpu.memory_space<vmem>>, vector<128x128xbf16>
    %cst_8 = arith.constant dense<0.000000e+00> : vector<8x128xf32>
    %10 = tpu.matmul %8, %9, %cst_8 {dimension_numbers = #tpu.dot_dimension_numbers<[1], [0], [0], [1], [0, 0, 1, 1], [], []>} : vector<8x128xbf16>, vector<128x128xbf16>, vector<8x128xf32> -> vector<8x128xf32>
    %c0_9 = arith.constant 0 : index
    %c0_10 = arith.constant 0 : index
    %11 = vector.load %arg5[%c0_9, %c0_10] : memref<1x128xf32, #tpu.memory_space<vmem>>, vector<1x128xf32>
    %12 = vector.broadcast %11 : vector<1x128xf32> to vector<8x128xf32>
    %13 = arith.addf %10, %12 : vector<8x128xf32>
    %cst_11 = arith.constant 0.000000e+00 : f32
    %14 = vector.broadcast %cst_11 : f32 to vector<8x128xf32>
    %15 = arith.maximumf %13, %14 : vector<8x128xf32>
    %c0_12 = arith.constant 0 : index
    %c0_13 = arith.constant 0 : index
    %16 = vector.load %arg6[%c0_12, %c0_13] : memref<1x128xf32, #tpu.memory_space<vmem>>, vector<1x128xf32>
    %17 = vector.broadcast %16 : vector<1x128xf32> to vector<8x128xf32>
    %18 = arith.mulf %15, %17 : vector<8x128xf32>
    %cst_14 = arith.constant dense<0.000000e+00> : vector<8xf32>
    %19 = vector.multi_reduction <add>, %18, %cst_14 [1] : vector<8x128xf32> to vector<8xf32>
    %20 = vector.shape_cast %19 : vector<8xf32> to vector<8x1xf32>
    %c0_15 = arith.constant 0 : index
    %c0_16 = arith.constant 0 : index
    %21 = vector.load %arg7[%c0_15, %c0_16] : memref<1x1xf32, #tpu.memory_space<vmem>>, vector<1x1xf32>
    %22 = vector.broadcast %21 : vector<1x1xf32> to vector<8x1xf32>
    %23 = arith.addf %20, %22 : vector<8x1xf32>
    %cst_17 = arith.constant 0.000000e+00 : f32
    %24 = vector.broadcast %cst_17 : f32 to vector<8x1xf32>
    %25 = arith.subf %24, %23 : vector<8x1xf32>
    %26 = math.exp %25 : vector<8x1xf32>
    %cst_18 = arith.constant 1.000000e+00 : f32
    %27 = vector.broadcast %cst_18 : f32 to vector<8x1xf32>
    %28 = arith.addf %27, %26 : vector<8x1xf32>
    %29 = tpu.reciprocal %28 {approx = true} : vector<8x1xf32> -> vector<8x1xf32>
    %c0_19 = arith.constant 0 : index
    %c0_20 = arith.constant 0 : index
    %30 = vector.load %arg8[%c0_19, %c0_20] : memref<8x1xf32, #tpu.memory_space<vmem>>, vector<8x1xf32>
    tpu.vector_store %arg8[%c0_19, %c0_20], %29 {strides = array<i32>} : memref<8x1xf32, #tpu.memory_space<vmem>>, vector<8x1xf32>,
    return
  }
  func.func @transform_0(%arg0: i32) -> (i32, i32) {
    %c0_i32 = arith.constant 0 : i32
    %c0_i32_0 = arith.constant 0 : i32
    return %arg0, %c0_i32 : i32, i32
  }
  func.func @transform_1(%arg0: i32) -> (i32, i32) {
    %c0_i32 = arith.constant 0 : i32
    %c0_i32_0 = arith.constant 0 : i32
    %c0_i32_1 = arith.constant 0 : i32
    return %c0_i32, %c0_i32_0 : i32, i32
  }
  func.func @transform_2(%arg0: i32) -> (i32, i32) {
    %c0_i32 = arith.constant 0 : i32
    %c0_i32_0 = arith.constant 0 : i32
    %c0_i32_1 = arith.constant 0 : i32
    return %c0_i32, %c0_i32_0 : i32, i32
  }
  func.func @transform_3(%arg0: i32) -> (i32, i32) {
    %c0_i32 = arith.constant 0 : i32
    %c0_i32_0 = arith.constant 0 : i32
    %c0_i32_1 = arith.constant 0 : i32
    return %c0_i32, %c0_i32_0 : i32, i32
  }
  func.func @transform_4(%arg0: i32) -> (i32, i32) {
    %c0_i32 = arith.constant 0 : i32
    %c0_i32_0 = arith.constant 0 : i32
    %c0_i32_1 = arith.constant 0 : i32
    return %c0_i32, %c0_i32_0 : i32, i32
  }
  func.func @transform_5(%arg0: i32) -> (i32, i32) {
    %c0_i32 = arith.constant 0 : i32
    %c0_i32_0 = arith.constant 0 : i32
    %c0_i32_1 = arith.constant 0 : i32
    return %c0_i32, %c0_i32_0 : i32, i32
  }
  func.func @transform_6(%arg0: i32) -> (i32, i32) {
    %c0_i32 = arith.constant 0 : i32
    %c0_i32_0 = arith.constant 0 : i32
    %c0_i32_1 = arith.constant 0 : i32
    return %c0_i32, %c0_i32_0 : i32, i32
  }
  func.func @transform_7(%arg0: i32) -> (i32, i32) {
    %c0_i32 = arith.constant 0 : i32
    %c0_i32_0 = arith.constant 0 : i32
    return %arg0, %c0_i32 : i32, i32
  }
}

</mosaic_0001>

<llo_original>
// kernel: tpu_custom_call.1
$region0: #{tpu_custom_call.1}
  #allocation0 [shape = 'u32[]', space=smem, size = 0x4, offset = 0x4, fixed_abs, tag = 'smem constant byte address 0x4 - core index']
  #allocation1 [shape = 'u32[144,128]{1,0:T(1,128)}', space=vmem, size = 0x12000, scoped, tag = 'internal scratch']
  #allocation2 [shape = 'f32[1,1]{1,0:T(1,128)S(1)}', space=vmem, size = 0x200, scoped, tag = 'scoped memory for tpu_custom_call.1']
  %s0 = inlined_call_operand.hbm [shape: bf16[8,200], index: 0, kind: input, shape index: {}]
  %s1 = inlined_call_operand.hbm [shape: bf16[200,128], index: 1, kind: input, shape index: {}]
  %s2 = inlined_call_operand.vmem [shape: f32[1,128], index: 2, kind: input, shape index: {}]
  %s3 = inlined_call_operand.hbm [shape: bf16[128,128], index: 3, kind: input, shape index: {}]
  %s4 = inlined_call_operand.vmem [shape: f32[1,128], index: 4, kind: input, shape index: {}]
  %s5 = inlined_call_operand.vmem [shape: f32[1,128], index: 5, kind: input, shape index: {}]
  %s6 = inlined_call_operand.<no memory space> [shape: f32[1,1], index: 6, kind: input, shape index: {}]
  %s7 = inlined_call_operand.vmem [shape: f32[8,1], index: 7, kind: output, shape index: {}]
  %s8 = sld [smem:[#allocation0]]
  $region50: #{tpu_custom_call.1} parent=0
    _
  %s10 = ssub.s32 1, %s8
  %s11 = scalar_select 0, %s10, %s8
  %v12 = vstv %s6
  %13 = vst [vmem:[#allocation2] sm:$0x1] %v12
  $region1: #{tpu_custom_call.1} parent=0
    #allocation3 [shape = 'u8[4096]{0}', space=vmem, size = 0x1000, scoped, tag = 'input window, operand 0, single buffered']
    #allocation4 [shape = 's32[1]{0}', space=sflag, size = 0x4, scoped, tag = 'scoped memory for tpu_custom_call.1']
    #allocation5 [shape = 'u8[51200]{0}', space=vmem, size = 0xc800, scoped, tag = 'input window, operand 1, single buffered']
    #allocation6 [shape = 's32[1]{0}', space=sflag, size = 0x4, scoped, tag = 'scoped memory for tpu_custom_call.1']
    #allocation7 [shape = 'u8[32768]{0}', space=vmem, size = 0x8000, scoped, tag = 'input window, operand 3, single buffered']
    %14 = vsyncpa [#allocation4], 0
    %15 = vsyncpa [#allocation6], 0
    // Predicated region
    $region2: #{tpu_custom_call.1} parent=1 // pred_check
      _
    $region3: #{tpu_custom_call.1} parent=1 // pred_check_branch
      %17 = sbr.rel (0) target = $region5
    $region4: #{tpu_custom_call.1} parent=1 // pred_region
      %s19 = ssub.s32 128, 128
      %20 = vsyncadd [#allocation4], %s19
      %s22 = sshll.u32 [#allocation3], 4
      %s23 = int_to_ptr.vmem [resolvable:$true] %s22
      %25 = dma.hbm_to_vmem [thread:$0]  %s0, 128, %s23, [#allocation4]
    $region5: #{tpu_custom_call.1} parent=1 // pred_fallthru
      _
    // Predicated region
    $region6: #{tpu_custom_call.1} parent=1 // pred_check
      _
    $region7: #{tpu_custom_call.1} parent=1 // pred_check_branch
      %27 = sbr.rel (0) target = $region9
    $region8: #{tpu_custom_call.1} parent=1 // pred_region
      %s29 = ssub.s32 1600, 1600
      %30 = vsyncadd [#allocation6], %s29
      %s31 = sshll.u32 [#allocation5], 4
      %s32 = int_to_ptr.vmem [resolvable:$true] %s31
      %37 = dma.hbm_to_vmem [thread:$0]  %s1, 1600, %s32, [#allocation6], 64, 64, 4
    $region9: #{tpu_custom_call.1} parent=1 // pred_fallthru
      _
    // Predicated region
    $region10: #{tpu_custom_call.1} parent=1 // pred_check
      _
    $region11: #{tpu_custom_call.1} parent=1 // pred_check_branch
      %39 = sbr.rel (0) target = $region13
    $region12: #{tpu_custom_call.1} parent=1 // pred_region
      _
    $region13: #{tpu_custom_call.1} parent=1 // pred_fallthru
      _
    // Predicated region
    $region14: #{tpu_custom_call.1} parent=1 // pred_check
      _
    $region15: #{tpu_custom_call.1} parent=1 // pred_check_branch
      %41 = sbr.rel (0) target = $region17
    $region16: #{tpu_custom_call.1} parent=1 // pred_region
      %s43 = ssub.s32 1024, 1024
      %44 = vsyncadd [#allocation6], %s43
      %s45 = sshll.u32 [#allocation7], 4
      %s46 = int_to_ptr.vmem [resolvable:$true] %s45
      %51 = dma.hbm_to_vmem [thread:$0]  %s3, 1024, %s46, [#allocation6], 64, 64, 4
    $region17: #{tpu_custom_call.1} parent=1 // pred_fallthru
      _
    // Predicated region
    $region18: #{tpu_custom_call.1} parent=1 // pred_check
      _
    $region19: #{tpu_custom_call.1} parent=1 // pred_check_branch
      %53 = sbr.rel (0) target = $region21
    $region20: #{tpu_custom_call.1} parent=1 // pred_region
      _
    $region21: #{tpu_custom_call.1} parent=1 // pred_fallthru
      _
    // Predicated region
    $region22: #{tpu_custom_call.1} parent=1 // pred_check
      _
    $region23: #{tpu_custom_call.1} parent=1 // pred_check_branch
      %55 = sbr.rel (0) target = $region25
    $region24: #{tpu_custom_call.1} parent=1 // pred_region
      _
    $region25: #{tpu_custom_call.1} parent=1 // pred_fallthru
      _
    // Predicated region
    $region26: #{tpu_custom_call.1} parent=1 // pred_check
      _
    $region27: #{tpu_custom_call.1} parent=1 // pred_check_branch
      %57 = sbr.rel (0) target = $region29
    $region28: #{tpu_custom_call.1} parent=1 // pred_region
      _
    $region29: #{tpu_custom_call.1} parent=1 // pred_fallthru
      _
    // Predicated region
    $region30: #{tpu_custom_call.1} parent=1 // pred_check
      _
    $region31: #{tpu_custom_call.1} parent=1 // pred_check_branch
      %59 = sbr.rel (0) target = $region33
    $region32: #{tpu_custom_call.1} parent=1 // pred_region
      %60 = dma.done [#allocation4], 128
    $region33: #{tpu_custom_call.1} parent=1 // pred_fallthru
      _
    // Predicated region
    $region34: #{tpu_custom_call.1} parent=1 // pred_check
      _
    $region35: #{tpu_custom_call.1} parent=1 // pred_check_branch
      %62 = sbr.rel (0) target = $region37
    $region36: #{tpu_custom_call.1} parent=1 // pred_region
      %63 = dma.done [#allocation6], 1600
    $region37: #{tpu_custom_call.1} parent=1 // pred_fallthru
      _
    // Predicated region
    $region38: #{tpu_custom_call.1} parent=1 // pred_check
      _
    $region39: #{tpu_custom_call.1} parent=1 // pred_check_branch
      %65 = sbr.rel (0) target = $region41
    $region40: #{tpu_custom_call.1} parent=1 // pred_region
      %66 = dma.done [#allocation6], 1024
    $region41: #{tpu_custom_call.1} parent=1 // pred_fallthru
      _
    %v68 = vld [vmem:[#allocation3] sm:$0xff]
    %v69 = vld [vmem:[#allocation5] sm:$0xf]
    %v70 = vld [vmem:[#allocation5 + $0x4] sm:$0xf]
    %v71 = vld [vmem:[#allocation5 + $0x8] sm:$0xf]
    %v72 = vld [vmem:[#allocation5 + $0xc] sm:$0xf]
    %v73 = vld [vmem:[#allocation5 + $0x10] sm:$0xf]
    %v74 = vld [vmem:[#allocation5 + $0x14] sm:$0xf]
    %v75 = vld [vmem:[#allocation5 + $0x18] sm:$0xf]
    %v76 = vld [vmem:[#allocation5 + $0x1c] sm:$0xf]
    %v77 = vld [vmem:[#allocation5 + $0x20] sm:$0xf]
    %v78 = vld [vmem:[#allocation5 + $0x24] sm:$0xf]
    %v79 = vld [vmem:[#allocation5 + $0x28] sm:$0xf]
    %v80 = vld [vmem:[#allocation5 + $0x2c] sm:$0xf]
    %v81 = vld [vmem:[#allocation5 + $0x30] sm:$0xf]
    %v82 = vld [vmem:[#allocation5 + $0x34] sm:$0xf]
    %v83 = vld [vmem:[#allocation5 + $0x38] sm:$0xf]
    %v84 = vld [vmem:[#allocation5 + $0x3c] sm:$0xf]
    %v85 = vld [vmem:[#allocation5 + $0x40] sm:$0xf]
    %v86 = vld [vmem:[#allocation5 + $0x44] sm:$0xf]
    %v87 = vld [vmem:[#allocation5 + $0x48] sm:$0xf]
    %v88 = vld [vmem:[#allocation5 + $0x4c] sm:$0xf]
    %v89 = vld [vmem:[#allocation5 + $0x50] sm:$0xf]
    %v90 = vld [vmem:[#allocation5 + $0x54] sm:$0xf]
    %v91 = vld [vmem:[#allocation5 + $0x58] sm:$0xf]
    %v92 = vld [vmem:[#allocation5 + $0x5c] sm:$0xf]
    %v93 = vld [vmem:[#allocation5 + $0x60] sm:$0xf]
    %v94 = vld [vmem:[%s2] sm:$0x1]
    %v96 = vlaneseq
    %v97 = vshrl.u32 %v96, 7
    %v98 = vsub.s32 0, %v97
    %v99 = vrot.slane %v94, %v98
    %v102 = vunpack.c.l.b16 %v68
    %v103 = vunpack.c.h.b16 %v68
    %v104 = vpack.c.b16 %v102, %v102
    %v105 = vpack.c.b16 %v103, %v103
    %v132 = vunpack.c.l.b16 %v69
    %v133 = vunpack.c.l.b16 %v70
    %v134 = vunpack.c.l.b16 %v71
    %v135 = vunpack.c.l.b16 %v72
    %v136 = vunpack.c.l.b16 %v73
    %v137 = vunpack.c.l.b16 %v74
    %v138 = vunpack.c.l.b16 %v75
    %v139 = vunpack.c.l.b16 %v76
    %v140 = vunpack.c.l.b16 %v77
    %v141 = vunpack.c.l.b16 %v78
    %v142 = vunpack.c.l.b16 %v79
    %v143 = vunpack.c.l.b16 %v80
    %v144 = vunpack.c.l.b16 %v81
    %v145 = vunpack.c.l.b16 %v82
    %v146 = vunpack.c.l.b16 %v83
    %v147 = vunpack.c.l.b16 %v84
    %v148 = vunpack.c.l.b16 %v85
    %v149 = vunpack.c.l.b16 %v86
    %v150 = vunpack.c.l.b16 %v87
    %v151 = vunpack.c.l.b16 %v88
    %v152 = vunpack.c.l.b16 %v89
    %v153 = vunpack.c.l.b16 %v90
    %v154 = vunpack.c.l.b16 %v91
    %v155 = vunpack.c.l.b16 %v92
    %v156 = vunpack.c.l.b16 %v93
    %v157 = vpack.c.b16 %v133, %v132
    %v158 = vpack.c.b16 %v135, %v134
    %v159 = vpack.c.b16 %v137, %v136
    %v160 = vpack.c.b16 %v139, %v138
    %v161 = vpack.c.b16 %v141, %v140
    %v162 = vpack.c.b16 %v143, %v142
    %v163 = vpack.c.b16 %v145, %v144
    %v164 = vpack.c.b16 %v147, %v146
    %v165 = vpack.c.b16 %v149, %v148
    %v166 = vpack.c.b16 %v151, %v150
    %v167 = vpack.c.b16 %v153, %v152
    %v168 = vpack.c.b16 %v155, %v154
    %v169 = vpack.c.b16 %v156, %v156
    %vm182 = vcmask 588800
    %v184 = vsel %vm182, %v105, 0
    %vm186 = vcmask 1043456
    %v188 = vsel %vm186, %v169, 0
    %190 = vmatprep.subr.bf16.mxu0 0
    %191 = vmatpush1.bf16.msra.mxu0 %v157
    %192 = vmatprep.subr.bf16.mxu0 0
    %193 = vmatpush1.bf16.msra.mxu0 %v158
    %194 = vmatprep.subr.bf16.mxu0 0
    %195 = vmatpush1.bf16.msra.mxu0 %v159
    %196 = vmatprep.subr.bf16.mxu0 0
    %197 = vmatpush1.bf16.msra.mxu0 %v160
    %198 = vmatprep.subr.bf16.mxu0 0
    %199 = vmatpush1.bf16.msra.mxu0 %v161
    %200 = vmatprep.subr.bf16.mxu0 0
    %201 = vmatpush1.bf16.msra.mxu0 %v162
    %202 = vmatprep.subr.bf16.mxu0 0
    %203 = vmatpush1.bf16.msra.mxu0 %v163
    %204 = vmatprep.subr.bf16.mxu0 0
    %205 = vmatpush1.bf16.msra.mxu0 %v164
    %206 = vmatprep.subr.bf16.mxu0 0
    %207 = vmatpush1.bf16.msra.mxu0 %v165
    %208 = vmatprep.subr.bf16.mxu0 0
    %209 = vmatpush1.bf16.msra.mxu0 %v166
    %210 = vmatprep.subr.bf16.mxu0 0
    %211 = vmatpush1.bf16.msra.mxu0 %v167
    %212 = vmatprep.subr.bf16.mxu0 0
    %213 = vmatpush1.bf16.msra.mxu0 %v168
    %214 = vmatprep.subr.bf16.mxu0 0
    %215 = vmatpush1.bf16.msra.mxu0 %v188
    %216 = vmatprep.subr.bf16.mxu0 0
    %217 = vmatpush1.bf16.msra.mxu0 0
    %218 = vmatprep.subr.bf16.mxu0 0
    %219 = vmatpush1.bf16.msra.mxu0 0
    %220 = vmatprep.subr.bf16.mxu0 0
    %221 = vmatpush1.bf16.msra.mxu0 0
    %222 = vmatprep.mubr.bf16.mxu0 %v184
    %223 = vmatmul.mubr.bf16.gmra.mrb[0].mxu0 %v104
    %v224 = vpop.f32.mrb[0].mxu0
    %v225 = vadd.f32 %v99, %v224
    %v226 = vpop.f32.mrb[0].mxu0
    %v227 = vpop.f32.mrb[0].mxu0
    %v228 = vpop.f32.mrb[0].mxu0
    %229 = vdwg.mxu0
    %v230 = vmax.f32 %v225, 0.0
    %v231 = vpack.c.bf16 %v230, %v230
    %v232 = vld [vmem:[#allocation7] sm:$0xf]
    %v233 = vld [vmem:[#allocation7 + $0x4] sm:$0xf]
    %v234 = vld [vmem:[#allocation7 + $0x8] sm:$0xf]
    %v235 = vld [vmem:[#allocation7 + $0xc] sm:$0xf]
    %v236 = vld [vmem:[#allocation7 + $0x10] sm:$0xf]
    %v237 = vld [vmem:[#allocation7 + $0x14] sm:$0xf]
    %v238 = vld [vmem:[#allocation7 + $0x18] sm:$0xf]
    %v239 = vld [vmem:[#allocation7 + $0x1c] sm:$0xf]
    %v240 = vld [vmem:[#allocation7 + $0x20] sm:$0xf]
    %v241 = vld [vmem:[#allocation7 + $0x24] sm:$0xf]
    %v242 = vld [vmem:[#allocation7 + $0x28] sm:$0xf]
    %v243 = vld [vmem:[#allocation7 + $0x2c] sm:$0xf]
    %v244 = vld [vmem:[#allocation7 + $0x30] sm:$0xf]
    %v245 = vld [vmem:[#allocation7 + $0x34] sm:$0xf]
    %v246 = vld [vmem:[#allocation7 + $0x38] sm:$0xf]
    %v247 = vld [vmem:[#allocation7 + $0x3c] sm:$0xf]
    %v248 = vld [vmem:[%s4] sm:$0x1]
    %v250 = vlaneseq
    %v251 = vshrl.u32 %v250, 7
    %v252 = vsub.s32 0, %v251
    %v253 = vrot.slane %v248, %v252
    %v271 = vunpack.c.l.b16 %v232
    %v272 = vunpack.c.l.b16 %v233
    %v273 = vunpack.c.l.b16 %v234
    %v274 = vunpack.c.l.b16 %v235
    %v275 = vunpack.c.l.b16 %v236
    %v276 = vunpack.c.l.b16 %v237
    %v277 = vunpack.c.l.b16 %v238
    %v278 = vunpack.c.l.b16 %v239
    %v279 = vunpack.c.l.b16 %v240
    %v280 = vunpack.c.l.b16 %v241
    %v281 = vunpack.c.l.b16 %v242
    %v282 = vunpack.c.l.b16 %v243
    %v283 = vunpack.c.l.b16 %v244
    %v284 = vunpack.c.l.b16 %v245
    %v285 = vunpack.c.l.b16 %v246
    %v286 = vunpack.c.l.b16 %v247
    %v287 = vpack.c.b16 %v272, %v271
    %v288 = vpack.c.b16 %v274, %v273
    %v289 = vpack.c.b16 %v276, %v275
    %v290 = vpack.c.b16 %v278, %v277
    %v291 = vpack.c.b16 %v280, %v279
    %v292 = vpack.c.b16 %v282, %v281
    %v293 = vpack.c.b16 %v284, %v283
    %v294 = vpack.c.b16 %v286, %v285
    %303 = vmatprep.subr.bf16.mxu0 0
    %304 = vmatpush1.bf16.msra.mxu0 %v287
    %305 = vmatprep.subr.bf16.mxu0 0
    %306 = vmatpush1.bf16.msra.mxu0 %v288
    %307 = vmatprep.subr.bf16.mxu0 0
    %308 = vmatpush1.bf16.msra.mxu0 %v289
    %309 = vmatprep.subr.bf16.mxu0 0
    %310 = vmatpush1.bf16.msra.mxu0 %v290
    %311 = vmatprep.subr.bf16.mxu0 0
    %312 = vmatpush1.bf16.msra.mxu0 %v291
    %313 = vmatprep.subr.bf16.mxu0 0
    %314 = vmatpush1.bf16.msra.mxu0 %v292
    %315 = vmatprep.subr.bf16.mxu0 0
    %316 = vmatpush1.bf16.msra.mxu0 %v293
    %317 = vmatprep.subr.bf16.mxu0 0
    %318 = vmatpush1.bf16.msra.mxu0 %v294
    %319 = vmatprep.subr.bf16.mxu0 0
    %320 = vmatpush1.bf16.msra.mxu0 0
    %321 = vmatprep.subr.bf16.mxu0 0
    %322 = vmatpush1.bf16.msra.mxu0 0
    %323 = vmatprep.subr.bf16.mxu0 0
    %324 = vmatpush1.bf16.msra.mxu0 0
    %325 = vmatprep.subr.bf16.mxu0 0
    %326 = vmatpush1.bf16.msra.mxu0 0
    %327 = vmatprep.subr.bf16.mxu0 0
    %328 = vmatpush1.bf16.msra.mxu0 0
    %329 = vmatprep.subr.bf16.mxu0 0
    %330 = vmatpush1.bf16.msra.mxu0 0
    %331 = vmatprep.subr.bf16.mxu0 0
    %332 = vmatpush1.bf16.msra.mxu0 0
    %333 = vmatprep.subr.bf16.mxu0 0
    %334 = vmatpush1.bf16.msra.mxu0 0
    %335 = vmatprep.mubr.bf16.mxu0 0
    %336 = vmatmul.mubr.bf16.gmra.mrb[0].mxu0 %v231
    %v337 = vpop.f32.mrb[0].mxu0
    %v338 = vadd.f32 %v253, %v337
    %v339 = vpop.f32.mrb[0].mxu0
    %v340 = vpop.f32.mrb[0].mxu0
    %v341 = vpop.f32.mrb[0].mxu0
    %342 = vdwg.mxu0
    %v343 = vmax.f32 %v338, 0.0
    %v344 = vld [vmem:[%s5] sm:$0x1]
    %v346 = vlaneseq
    %v347 = vshrl.u32 %v346, 7
    %v348 = vsub.s32 0, %v347
    %v349 = vrot.slane %v344, %v348
    %v351 = vmul.f32 %v343, %v349
    %352 = vadd.xlane.f32.xlu0 %v351
    %v353 = vpop.xlane.xlu0 %352
    %v354 = vld [vmem:[#allocation2] sm:$0x1]
    %v356 = vlaneseq
    %v357 = vshrl.u32 %v356, 7
    %v358 = vsub.s32 0, %v357
    %v359 = vrot.slane %v354, %v358
    %v361 = vadd.f32 %v353, %v359
    %v362 = vsub.f32 0.0, %v361
    %v363 = vmul.f32 %v362, 1.442695
    %v364 = vpow.pop %v363
    %v365 = vadd.f32 %v364, 1.0
    %v366 = vrcp.pop %v365
    %vm367 = vcmask 7168
    %368 = vst.msk [vmem:[%s7] sm:$0xff] %vm367, %v366
    // Predicated region
    $region42: #{tpu_custom_call.1} parent=1 // pred_check
      _
    $region43: #{tpu_custom_call.1} parent=1 // pred_check_branch
      %370 = sbr.rel (0) target = $region45
    $region44: #{tpu_custom_call.1} parent=1 // pred_region
      _
    $region45: #{tpu_custom_call.1} parent=1 // pred_fallthru
      _
    // Predicated region
    $region46: #{tpu_custom_call.1} parent=1 // pred_check
      _
    $region47: #{tpu_custom_call.1} parent=1 // pred_check_branch
      %372 = sbr.rel (0) target = $region49
    $region48: #{tpu_custom_call.1} parent=1 // pred_region
      _
    $region49: #{tpu_custom_call.1} parent=1 // pred_fallthru
      _
    %373 = vsyncpa [#allocation4], 1
    %374 = vsyncpa [#allocation6], 1

</llo_original>
